<compile_context>
chip_gen: v7x
topology: tpu7x:2x2x1
jax: 0.10.0
libtpu: 0.0.40
codegen_flags: <defaults>
</compile_context>

<pallas_src>
import functools
import math

import jax
import jax.numpy as jnp
from jax.experimental import pallas as pl
from jax.experimental.pallas import tpu as pltpu


_LANES = 128
_PAD_LOGIT = -1e9  # pad logit: exp(-|x|)=0, ce=0, (1-p_t)=0 -> zero loss


def _cdiv(a, b):
    return -(-a // b)


def _round_up(x, m):
    return _cdiv(x, m) * m


def _focal_kernel(x_ref, t_ref, out_ref, *, gamma, alpha, rows, block_rows,
                  blocks_per_split, need_mask):
    """Focal loss over one (block_rows, 128) tile, accumulated into out_ref."""
    c = pl.program_id(0)
    i = pl.program_id(1)

    # Zero this split's resident partial-sum slab at the start of the
    # reduction axis.
    @pl.when(i == 0)
    def _():
        out_ref[...] = jnp.zeros_like(out_ref)

    x = x_ref[...].astype(jnp.float32)
    t = t_ref[...].astype(jnp.float32)

    # One EUP exp shared by the sigmoid and the stable BCE log term.
    e = jnp.exp(-jnp.abs(x))                    # exp(-|x|)
    inv = pl.reciprocal(1.0 + e)                # 1 / (1 + exp(-|x|))
    prob = jnp.where(x >= 0, inv, e * inv)      # == sigmoid(x)

    # Numerically-stable BCE with logits (== torch BCEWithLogits, 'none').
    ce = jnp.maximum(x, 0.0) - x * t + jnp.log1p(e)

    one_minus_pt = (1.0 - prob) * t + prob * (1.0 - t)   # == 1 - p_t

    # (1 - p_t) ** gamma: expand small static integer gamma into multiplies
    # (avoids a per-element pow = exp + log on the EUP).
    if isinstance(gamma, int) and 0 <= gamma <= 8:
        if gamma == 0:
            mod = jnp.ones_like(one_minus_pt)
        else:
            mod = one_minus_pt
            for _ in range(gamma - 1):
                mod = mod * one_minus_pt
    else:
        mod = one_minus_pt ** gamma

    loss = ce * mod
    if alpha >= 0:  # static (module hyper-parameter) branch
        loss = (alpha * t + (1.0 - alpha) * (1.0 - t)) * loss

    if need_mask:
        # Rows at/after `rows` were never written in HBM (partial / clamped
        # trailing blocks): zero them so they contribute nothing.
        row_start = (c * blocks_per_split + i) * block_rows
        row_ids = jax.lax.broadcasted_iota(jnp.int32, loss.shape, 0)
        loss = jnp.where(row_ids < rows - row_start, loss, 0.0)

    # Lane/sublane-parallel partial sums: reshape groups whole (8,128) vreg
    # tiles, so this is pure VPU adds across vregs (no per-step XLU reduce).
    out_ref[0] += jnp.sum(loss.reshape(-1, 8, _LANES), axis=0)


def focal_loss(inputs, targets, num_masks, *, gamma, alpha=-1.0,
               block_rows=8192, num_splits=2):
    """JAX/Pallas equivalent of FocalLoss(gamma, alpha)(inputs, targets, num_masks)."""
    assert inputs.shape == targets.shape
    n = inputs.shape[0]
    d = math.prod(inputs.shape[1:])          # per-example flattened length
    total = n * d

    # Sublane multiple safe for the streamed dtypes (f32: 8, bf16: 16, i8: 32).
    min_item = min(jnp.dtype(inputs.dtype).itemsize,
                   jnp.dtype(targets.dtype).itemsize)
    sub = max(8, 32 // min_item)

    # Flatten to a lane-dense (rows, 128) slab.  Pad only to a 128 multiple;
    # in the common case (total % 128 == 0) this is a free reshape (no copy).
    lane_pad = (-total) % _LANES
    rows = (total + lane_pad) // _LANES
    xf = inputs.reshape(-1)
    tf = targets.reshape(-1)
    if lane_pad:
        # TODO(synk): only path that forces a full-array HBM copy; a manual
        # tail path isn't worth it for <128 trailing elements.
        xf = jnp.pad(xf, (0, lane_pad), constant_values=_PAD_LOGIT)
        tf = jnp.pad(tf, (0, lane_pad), constant_values=0)
    x2 = xf.reshape(rows, _LANES)
    t2 = tf.reshape(rows, _LANES)

    # Fit the block size to the data instead of padding the data to the grid.
    num_splits = max(1, int(num_splits))
    bps = _cdiv(rows, num_splits * block_rows)                 # blocks / split
    br = _round_up(_cdiv(rows, num_splits * bps), sub)         # rows / block
    capacity = num_splits * bps * br
    need_mask = capacity != rows
    last_block = _cdiv(rows, br) - 1                           # last in-range block

    def in_idx_map(c, i, _bps=bps, _last=last_block):
        # Clamp so trailing (fully out-of-range) blocks never DMA out of
        # bounds; the kernel's row mask zeroes their contribution.
        return (jnp.minimum(c * _bps + i, _last), 0)

    kernel = functools.partial(
        _focal_kernel, gamma=gamma, alpha=alpha, rows=rows,
        block_rows=br, blocks_per_split=bps, need_mask=need_mask)

    partials = pl.pallas_call(
        kernel,
        out_shape=jax.ShapeDtypeStruct((num_splits, 8, _LANES), jnp.float32),
        grid_spec=pltpu.PrefetchScalarGridSpec(
            num_scalar_prefetch=0,
            grid=(num_splits, bps),
            in_specs=[
                pl.BlockSpec((br, _LANES), in_idx_map),
                pl.BlockSpec((br, _LANES), in_idx_map),
            ],
            out_specs=pl.BlockSpec((1, 8, _LANES), lambda c, i: (c, 0, 0)),
        ),
        compiler_params=pltpu.CompilerParams(
            dimension_semantics=("parallel", "arbitrary"),
            # 2 inputs x 2 pipeline buffers x <=4 MiB (f32, 8192x128) = 16 MiB;
            # 32 MiB scoped limit fits v5e/v6e/v7x with headroom.
            vmem_limit_bytes=32 * 1024 * 1024,
        ),
    )(x2, t2)

    total_loss = jnp.sum(partials)
    # loss.mean(1).sum() / num_masks == total_sum / D / num_masks (rows share D)
    return total_loss / jnp.float32(d) / jnp.float32(num_masks)


def _focal_loss_ref(inputs, targets, num_masks, *, gamma, alpha=-1.0):
    """Pure-JAX reference mirroring the PyTorch module, for verification."""
    n = inputs.shape[0]
    x = inputs.reshape(n, -1).astype(jnp.float32)
    t = targets.reshape(n, -1).astype(jnp.float32)
    prob = jax.nn.sigmoid(x)
    ce = jnp.maximum(x, 0.0) - x * t + jnp.log1p(jnp.exp(-jnp.abs(x)))
    p_t = prob * t + (1.0 - prob) * (1.0 - t)
    loss = ce * (1.0 - p_t) ** gamma
    if alpha >= 0:
        alpha_t = alpha * t + (1.0 - alpha) * (1.0 - t)
        loss = alpha_t * loss
    return loss.mean(axis=1).sum() / num_masks


if __name__ == "__main__":
    # Module hyper-parameters (deterministic, set in-script).
    gamma = 2
    alpha = 0.25

    # Small shapes consistent with dense-mask predictions: (B, C, H, W).
    key = jax.random.PRNGKey(0)
    k1, k2 = jax.random.split(key)
    inputs = jax.random.normal(k1, (2, 4, 16, 16), dtype=jnp.float32)
    targets = (jax.random.uniform(k2, (2, 4, 16, 16)) > 0.5).astype(jnp.float32)
    num_masks = 2

    out = jax.block_until_ready(
        focal_loss(inputs, targets, num_masks, gamma=gamma, alpha=alpha))
    ref = _focal_loss_ref(inputs, targets, num_masks, gamma=gamma, alpha=alpha)
    assert jnp.allclose(out, ref, rtol=1e-5, atol=1e-6), (out, ref)

    # alpha < 0 (no weighting) path.
    out_na = jax.block_until_ready(
        focal_loss(inputs, targets, num_masks, gamma=gamma, alpha=-1.0))
    ref_na = _focal_loss_ref(inputs, targets, num_masks, gamma=gamma, alpha=-1.0)
    assert jnp.allclose(out_na, ref_na, rtol=1e-5, atol=1e-6), (out_na, ref_na)

    # bf16 streaming path (halves HBM traffic; exercises the masked/clamped
    # trailing-block path since 16 rows round up to a 16-row bf16 block).
    out_bf = jax.block_until_ready(
        focal_loss(inputs.astype(jnp.bfloat16), targets.astype(jnp.bfloat16),
                   num_masks, gamma=gamma, alpha=alpha))
    assert jnp.allclose(out_bf, ref, rtol=5e-2, atol=1e-3), (out_bf, ref)

    # Odd row count exercising the in-kernel row mask with f32 blocks.
    k3, k4 = jax.random.split(k1)
    inputs_o = jax.random.normal(k3, (3, 3, 24, 16), dtype=jnp.float32)
    targets_o = (jax.random.uniform(k4, (3, 3, 24, 16)) > 0.5).astype(jnp.float32)
    out_o = jax.block_until_ready(
        focal_loss(inputs_o, targets_o, 3, gamma=gamma, alpha=alpha))
    ref_o = _focal_loss_ref(inputs_o, targets_o, 3, gamma=gamma, alpha=alpha)
    assert jnp.allclose(out_o, ref_o, rtol=1e-5, atol=1e-6), (out_o, ref_o)

    print("KERNEL_OK")
</pallas_src>

<mosaic_0001>
module attributes {stable_mosaic.version = 11 : i64} {
  func.func @_focal_kernel(%arg0: i32, %arg1: i32, %arg2: memref<8x128xf32, #tpu.memory_space<vmem>>, %arg3: memref<8x128xf32, #tpu.memory_space<vmem>>, %arg4: memref<1x8x128xf32, #tpu.memory_space<vmem>>) attributes {dimension_semantics = [#tpu.dimension_semantics<parallel>, #tpu.dimension_semantics<arbitrary>], iteration_bounds = array<i64: 2, 1>, scalar_prefetch = 0 : i64, scratch_operands = 0 : i64, tpu.core_type = #tpu.core_type<tc>, window_params = [{transform_indices = @transform_0, window_bounds = array<i64: 8, 128>}, {transform_indices = @transform_1, window_bounds = array<i64: 8, 128>}, {transform_indices = @transform_2, window_bounds = array<i64: 1, 8, 128>}]} {
    %c0_i32 = arith.constant 0 : i32
    %0 = arith.cmpi eq, %arg1, %c0_i32 : i32
    %1 = arith.extui %0 : i1 to i32
    %c0_i32_0 = arith.constant 0 : i32
    %2 = arith.cmpi ne, %1, %c0_i32_0 : i32
    scf.if %2 {
      %cst_19 = arith.constant 0.000000e+00 : f32
      %47 = vector.broadcast %cst_19 : f32 to vector<1x8x128xf32>
      %c0_20 = arith.constant 0 : index
      %c0_21 = arith.constant 0 : index
      %c0_22 = arith.constant 0 : index
      %48 = vector.load %arg4[%c0_20, %c0_21, %c0_22] : memref<1x8x128xf32, #tpu.memory_space<vmem>>, vector<1x8x128xf32>
      tpu.vector_store %arg4[%c0_20, %c0_21, %c0_22], %47 {strides = array<i32>} : memref<1x8x128xf32, #tpu.memory_space<vmem>>, vector<1x8x128xf32>,
    } else {
    }
    %c0 = arith.constant 0 : index
    %c0_1 = arith.constant 0 : index
    %3 = vector.load %arg2[%c0, %c0_1] : memref<8x128xf32, #tpu.memory_space<vmem>>, vector<8x128xf32>
    %c0_2 = arith.constant 0 : index
    %c0_3 = arith.constant 0 : index
    %4 = vector.load %arg3[%c0_2, %c0_3] : memref<8x128xf32, #tpu.memory_space<vmem>>, vector<8x128xf32>
    %5 = math.absf %3 : vector<8x128xf32>
    %cst = arith.constant 0.000000e+00 : f32
    %6 = vector.broadcast %cst : f32 to vector<8x128xf32>
    %7 = arith.subf %6, %5 : vector<8x128xf32>
    %8 = math.exp %7 : vector<8x128xf32>
    %cst_4 = arith.constant 1.000000e+00 : f32
    %9 = vector.broadcast %cst_4 : f32 to vector<8x128xf32>
    %10 = arith.addf %9, %8 : vector<8x128xf32>
    %11 = tpu.reciprocal %10 : vector<8x128xf32> -> vector<8x128xf32>
    %cst_5 = arith.constant 0.000000e+00 : f32
    %12 = vector.broadcast %cst_5 : f32 to vector<8x128xf32>
    %13 = arith.cmpf oge, %3, %12 : vector<8x128xf32>
    %14 = arith.mulf %8, %11 : vector<8x128xf32>
    %15 = arith.select %13, %11, %14 : vector<8x128xi1>, vector<8x128xf32>
    %cst_6 = arith.constant 0.000000e+00 : f32
    %16 = vector.broadcast %cst_6 : f32 to vector<8x128xf32>
    %17 = arith.maximumf %3, %16 : vector<8x128xf32>
    %18 = arith.mulf %3, %4 : vector<8x128xf32>
    %19 = arith.subf %17, %18 : vector<8x128xf32>
    %20 = math.log1p %8 : vector<8x128xf32>
    %21 = arith.addf %19, %20 : vector<8x128xf32>
    %cst_7 = arith.constant 1.000000e+00 : f32
    %22 = vector.broadcast %cst_7 : f32 to vector<8x128xf32>
    %23 = arith.subf %22, %15 : vector<8x128xf32>
    %24 = arith.mulf %23, %4 : vector<8x128xf32>
    %cst_8 = arith.constant 1.000000e+00 : f32
    %25 = vector.broadcast %cst_8 : f32 to vector<8x128xf32>
    %26 = arith.subf %25, %4 : vector<8x128xf32>
    %27 = arith.mulf %15, %26 : vector<8x128xf32>
    %28 = arith.addf %24, %27 : vector<8x128xf32>
    %29 = arith.mulf %28, %28 : vector<8x128xf32>
    %30 = arith.mulf %21, %29 : vector<8x128xf32>
    %cst_9 = arith.constant 2.500000e-01 : f32
    %31 = vector.broadcast %cst_9 : f32 to vector<8x128xf32>
    %32 = arith.mulf %31, %4 : vector<8x128xf32>
    %cst_10 = arith.constant 1.000000e+00 : f32
    %33 = vector.broadcast %cst_10 : f32 to vector<8x128xf32>
    %34 = arith.subf %33, %4 : vector<8x128xf32>
    %cst_11 = arith.constant 7.500000e-01 : f32
    %35 = vector.broadcast %cst_11 : f32 to vector<8x128xf32>
    %36 = arith.mulf %35, %34 : vector<8x128xf32>
    %37 = arith.addf %32, %36 : vector<8x128xf32>
    %38 = arith.mulf %37, %30 : vector<8x128xf32>
    %c0_12 = arith.constant 0 : index
    %c0_13 = arith.constant 0 : index
    %c0_14 = arith.constant 0 : index
    %39 = vector.load %arg4[%c0_12, %c0_13, %c0_14] : memref<1x8x128xf32, #tpu.memory_space<vmem>>, vector<1x8x128xf32>
    %40 = vector.shape_cast %39 : vector<1x8x128xf32> to vector<8x128xf32>
    %41 = vector.shape_cast %38 : vector<8x128xf32> to vector<1x8x128xf32>
    %cst_15 = arith.constant dense<0.000000e+00> : vector<8x128xf32>
    %42 = vector.multi_reduction <add>, %41, %cst_15 [0] : vector<1x8x128xf32> to vector<8x128xf32>
    %43 = arith.addf %40, %42 : vector<8x128xf32>
    %c0_16 = arith.constant 0 : index
    %c0_17 = arith.constant 0 : index
    %c0_18 = arith.constant 0 : index
    %44 = vector.load %arg4[%c0_16, %c0_17, %c0_18] : memref<1x8x128xf32, #tpu.memory_space<vmem>>, vector<1x8x128xf32>
    %45 = vector.shape_cast %44 : vector<1x8x128xf32> to vector<8x128xf32>
    %46 = vector.shape_cast %43 : vector<8x128xf32> to vector<1x8x128xf32>
    tpu.vector_store %arg4[%c0_16, %c0_17, %c0_18], %46 {strides = array<i32>} : memref<1x8x128xf32, #tpu.memory_space<vmem>>, vector<1x8x128xf32>,
    return
  }
  func.func @transform_0(%arg0: i32, %arg1: i32) -> (i32, i32) {
    %c1_i32 = arith.constant 1 : i32
    %0 = arith.muli %arg0, %c1_i32 : i32
    %1 = arith.addi %0, %arg1 : i32
    %c1_i32_0 = arith.constant 1 : i32
    %2 = arith.minsi %1, %c1_i32_0 : i32
    %c0_i32 = arith.constant 0 : i32
    %c0_i32_1 = arith.constant 0 : i32
    return %2, %c0_i32 : i32, i32
  }
  func.func @transform_1(%arg0: i32, %arg1: i32) -> (i32, i32) {
    %c1_i32 = arith.constant 1 : i32
    %0 = arith.muli %arg0, %c1_i32 : i32
    %1 = arith.addi %0, %arg1 : i32
    %c1_i32_0 = arith.constant 1 : i32
    %2 = arith.minsi %1, %c1_i32_0 : i32
    %c0_i32 = arith.constant 0 : i32
    %c0_i32_1 = arith.constant 0 : i32
    return %2, %c0_i32 : i32, i32
  }
  func.func @transform_2(%arg0: i32, %arg1: i32) -> (i32, i32, i32) {
    %c0_i32 = arith.constant 0 : i32
    %c0_i32_0 = arith.constant 0 : i32
    %c0_i32_1 = arith.constant 0 : i32
    return %arg0, %c0_i32, %c0_i32_0 : i32, i32, i32
  }
}

</mosaic_0001>

<llo_original>
// kernel: tpu_custom_call.1
$region0: #{tpu_custom_call.1}
  #allocation0 [shape = 'u32[]', space=smem, size = 0x4, offset = 0x4, fixed_abs, tag = 'smem constant byte address 0x4 - core index']
  #allocation1 [shape = 'u32[144,128]{1,0:T(1,128)}', space=vmem, size = 0x12000, scoped, tag = 'internal scratch']
  %s0 = inlined_call_operand.hbm [shape: f32[16,128], index: 0, kind: input, shape index: {}]
  %s1 = inlined_call_operand.hbm [shape: f32[16,128], index: 1, kind: input, shape index: {}]
  %s2 = inlined_call_operand.hbm [shape: f32[2,8,128], index: 2, kind: output, shape index: {}]
  %s3 = sld [smem:[#allocation0]]
  $region53: #{tpu_custom_call.1} parent=0
    _
  %s5 = ssub.s32 1, %s3
  %s6 = scalar_select 0, %s5, %s3
  $region1: #{tpu_custom_call.1} parent=0
    #allocation2 [shape = 'u8[8192]{0}', space=vmem, size = 0x2000, scoped, tag = 'input window, operand 0']
    #allocation3 [shape = 's32[2]{0}', space=sflag, size = 0x8, scoped, tag = 'scoped memory for tpu_custom_call.1']
    #allocation4 [shape = 's32[2]{0}', space=sflag, size = 0x8, scoped, tag = 'scoped memory for tpu_custom_call.1']
    #allocation5 [shape = 'u8[8192]{0}', space=vmem, size = 0x2000, scoped, tag = 'input window, operand 1']
    #allocation6 [shape = 's32[2]{0}', space=sflag, size = 0x8, scoped, tag = 'scoped memory for tpu_custom_call.1']
    #allocation7 [shape = 'u8[8192]{0}', space=vmem, size = 0x2000, scoped, tag = 'output window, operand 0']
    %7 = vsyncpa [#allocation3], 0
    %s8 = scalar_lea.sflag [#allocation3], 1
    %9 = vsyncpa %s8, 0
    %10 = vsyncpa [#allocation6], 0
    %s11 = scalar_lea.sflag [#allocation6], 1
    %12 = vsyncpa %s11, 0
    %13 = vsyncpa [#allocation4], 0
    %s14 = scalar_lea.sflag [#allocation4], 1
    %15 = vsyncpa %s14, 0
    loop: start=0, step=1, limit=4
    $region2: #{tpu_custom_call.1} parent=1 // loop_pre_header
      _
    $region3: #{tpu_custom_call.1} parent=1 // loop_header
      %s17 = sphi 0, %s21
      %p18 = scmp.ge.s32.totalorder %s17, 4
      %s24 = sphi 0, %s36
      %s25 = sphi 0, %s32
      %s26 = sphi 0, %s24
      %s27 = sphi 0, %s25
      %s28 = sphi 0, %s26
      %s29 = sphi 0, %s27
      %s45 = sphi 0, %s47
      %s48 = sphi 0, %s45
      %s49 = sphi 0, %s48
      %s65 = sphi 0, %s49
      %s77 = sphi 0, %s79
      %s80 = sphi 0, %s77
      %s81 = sphi 0, %s80
      %s97 = sphi 0, %s81
      %s103 = sphi 0, %s105
      %s106 = sphi 0, %s103
      %s107 = sphi 0, %s106
      %s123 = sphi 0, %s107
    $region4: #{tpu_custom_call.1} parent=1 // loop_header_branch
      %20 = sbr.rel (%p18) target = $region8
    $region5: #{tpu_custom_call.1} parent=1 // loop_body
      %s22 = ssub.s32 %s17, 1
      %s23 = ssub.s32 %s17, 2
      %s30 = sadd.s32 1, %s25
      %p31 = scmp.ge.s32.totalorder %s30, 1
      %s32 = scalar_select %p31, 0, %s30
      %s33 = sadd.s32 1, %s24
      %s34 = scalar_select %p31, %s33, %s24
      %p35 = scmp.ge.s32.totalorder %s34, 2
      %s36 = scalar_select %p35, 0, %s34
      %s37 = sadd.s32 %s24, %s25
      %p38 = scmp.lt.s32.totalorder %s37, 1
      %s39 = scalar_select %p38, %s37, 1
      %s40 = sadd.s32 %s36, %s32
      %p41 = scmp.lt.s32.totalorder %s40, 1
      %s42 = scalar_select %p41, %s40, 1
      %s43 = ssub.s32 %s39, %s42
      %p44 = scmp.eq.s32.totalorder %s43, 0
      %s46 = sadd.s32 %s45, 1
      %s47 = scalar_select %p44, %s45, %s46
      %p50 = pneg %p44
      %p51 = scmp.eq.s32.totalorder %s17, 1
      %p52 = por %p50, %p51
      %p53 = scmp.ne.s32.totalorder %s45, %s48
      %p54 = scmp.eq.s32.totalorder %s17, 0
      %p55 = por %p53, %p54
      %p56 = scmp.ne.s32.totalorder %s45, %s48
      %p57 = scmp.eq.s32.totalorder %s22, 1
      %p58 = por %p56, %p57
      %p59 = scmp.ne.s32.totalorder %s48, %s49
      %p60 = scmp.eq.s32.totalorder %s22, 0
      %p61 = por %p59, %p60
      %p62 = scmp.ne.s32.totalorder %s48, %s49
      %p63 = scmp.eq.s32.totalorder %s23, 1
      %p64 = por %p62, %p63
      %p66 = scmp.ne.s32.totalorder %s49, %s65
      %p67 = scmp.eq.s32.totalorder %s23, 0
      %p68 = por %p66, %p67
      %s69 = sadd.s32 %s24, %s25
      %p70 = scmp.lt.s32.totalorder %s69, 1
      %s71 = scalar_select %p70, %s69, 1
      %s72 = sadd.s32 %s36, %s32
      %p73 = scmp.lt.s32.totalorder %s72, 1
      %s74 = scalar_select %p73, %s72, 1
      %s75 = ssub.s32 %s71, %s74
      %p76 = scmp.eq.s32.totalorder %s75, 0
      %s78 = sadd.s32 %s77, 1
      %s79 = scalar_select %p76, %s77, %s78
      %p82 = pneg %p76
      %p83 = scmp.eq.s32.totalorder %s17, 1
      %p84 = por %p82, %p83
      %p85 = scmp.ne.s32.totalorder %s77, %s80
      %p86 = scmp.eq.s32.totalorder %s17, 0
      %p87 = por %p85, %p86
      %p88 = scmp.ne.s32.totalorder %s77, %s80
      %p89 = scmp.eq.s32.totalorder %s22, 1
      %p90 = por %p88, %p89
      %p91 = scmp.ne.s32.totalorder %s80, %s81
      %p92 = scmp.eq.s32.totalorder %s22, 0
      %p93 = por %p91, %p92
      %p94 = scmp.ne.s32.totalorder %s80, %s81
      %p95 = scmp.eq.s32.totalorder %s23, 1
      %p96 = por %p94, %p95
      %p98 = scmp.ne.s32.totalorder %s81, %s97
      %p99 = scmp.eq.s32.totalorder %s23, 0
      %p100 = por %p98, %p99
      %s101 = ssub.s32 %s24, %s36
      %p102 = scmp.eq.s32.totalorder %s101, 0
      %s104 = sadd.s32 %s103, 1
      %s105 = scalar_select %p102, %s103, %s104
      %p108 = pneg %p102
      %p109 = scmp.eq.s32.totalorder %s17, 1
      %p110 = por %p108, %p109
      %p111 = scmp.ne.s32.totalorder %s103, %s106
      %p112 = scmp.eq.s32.totalorder %s17, 0
      %p113 = por %p111, %p112
      %p114 = scmp.ne.s32.totalorder %s103, %s106
      %p115 = scmp.eq.s32.totalorder %s22, 1
      %p116 = por %p114, %p115
      %p117 = scmp.ne.s32.totalorder %s106, %s107
      %p118 = scmp.eq.s32.totalorder %s22, 0
      %p119 = por %p117, %p118
      %p120 = scmp.ne.s32.totalorder %s106, %s107
      %p121 = scmp.eq.s32.totalorder %s23, 1
      %p122 = por %p120, %p121
      %p124 = scmp.ne.s32.totalorder %s107, %s123
      %p125 = scmp.eq.s32.totalorder %s23, 0
      %p126 = por %p124, %p125
      %p127 = scmp.le.s32.totalorder 1, %s17
      %p128 = scmp.lt.s32.totalorder %s17, 3
      %p129 = pnand %p127, %p128
      %p130 = pneg %p129
      // Predicated region
      $region9: #{tpu_custom_call.1} parent=5 // pred_check
        _
      $region10: #{tpu_custom_call.1} parent=5 // pred_check_branch
        %132 = sbr.rel (%p129) target = $region12
      $region11: #{tpu_custom_call.1} parent=5 // pred_region
        %s133 = ssub.s32 %s17, 1
      $region12: #{tpu_custom_call.1} parent=5 // pred_fallthru
        _
      %p134 = scmp.lt.s32.totalorder %s17, 2
      // Predicated region
      $region13: #{tpu_custom_call.1} parent=5 // pred_check
        %p135 = pneg %p134
      $region14: #{tpu_custom_call.1} parent=5 // pred_check_branch
        %137 = sbr.rel (%p135) target = $region16
      $region15: #{tpu_custom_call.1} parent=5 // pred_region
        // Predicated region
        $region17: #{tpu_custom_call.1} parent=15 // pred_check
          %p138 = pneg %p55
        $region18: #{tpu_custom_call.1} parent=15 // pred_check_branch
          %140 = sbr.rel (%p138) target = $region20
        $region19: #{tpu_custom_call.1} parent=15 // pred_region
          %s141 = sand.u32 %s45, 1
          %s142 = scalar_lea.sflag [#allocation3], %s141
          %s143 = sand.u32 %s45, 1
          %s144 = smul.addr %s143, 8
          %s145 = scalar_lea.vmem [#allocation2], %s144
          %s146 = sadd.s32 %s24, %s25
          %p147 = scmp.lt.s32.totalorder %s146, 1
          %s148 = scalar_select %p147, %s146, 1
          %s150 = ssub.s32 128, 128
          %151 = vsyncadd %s142, %s150
          %s152 = smul.addr %s148, 128
          %s153 = scalar_lea.hbm %s0, %s152
          %s155 = sshll.u32 %s145, 4
          %s156 = int_to_ptr.vmem [resolvable:$true] %s155
          %158 = dma.hbm_to_vmem [thread:$0]  %s153, 128, %s156, %s142
        $region20: #{tpu_custom_call.1} parent=15 // pred_fallthru
          _
        // Predicated region
        $region21: #{tpu_custom_call.1} parent=15 // pred_check
          %p159 = pneg %p87
        $region22: #{tpu_custom_call.1} parent=15 // pred_check_branch
          %161 = sbr.rel (%p159) target = $region24
        $region23: #{tpu_custom_call.1} parent=15 // pred_region
          %s162 = sand.u32 %s77, 1
          %s163 = scalar_lea.sflag [#allocation6], %s162
          %s164 = sand.u32 %s77, 1
          %s165 = smul.addr %s164, 8
          %s166 = scalar_lea.vmem [#allocation5], %s165
          %s167 = sadd.s32 %s24, %s25
          %p168 = scmp.lt.s32.totalorder %s167, 1
          %s169 = scalar_select %p168, %s167, 1
          %s171 = ssub.s32 128, 128
          %172 = vsyncadd %s163, %s171
          %s173 = smul.addr %s169, 128
          %s174 = scalar_lea.hbm %s1, %s173
          %s176 = sshll.u32 %s166, 4
          %s177 = int_to_ptr.vmem [resolvable:$true] %s176
          %179 = dma.hbm_to_vmem [thread:$0]  %s174, 128, %s177, %s163
        $region24: #{tpu_custom_call.1} parent=15 // pred_fallthru
          _
      $region16: #{tpu_custom_call.1} parent=5 // pred_fallthru
        _
      %p180 = scmp.le.s32.totalorder 1, %s17
      %p181 = scmp.lt.s32.totalorder %s17, 3
      %p182 = pnand %p180, %p181
      %p183 = pneg %p182
      // Predicated region
      $region25: #{tpu_custom_call.1} parent=5 // pred_check
        _
      $region26: #{tpu_custom_call.1} parent=5 // pred_check_branch
        %185 = sbr.rel (%p182) target = $region28
      $region27: #{tpu_custom_call.1} parent=5 // pred_region
        %s186 = ssub.s32 %s17, 1
        %s187 = sand.u32 %s48, 1
        %s188 = scalar_lea.sflag [#allocation3], %s187
        %s189 = sand.u32 %s48, 1
        %s190 = smul.addr %s189, 8
        %s191 = scalar_lea.vmem [#allocation2], %s190
        // Predicated region
        $region29: #{tpu_custom_call.1} parent=27 // pred_check
          %p192 = pneg %p61
        $region30: #{tpu_custom_call.1} parent=27 // pred_check_branch
          %194 = sbr.rel (%p192) target = $region32
        $region31: #{tpu_custom_call.1} parent=27 // pred_region
          %195 = dma.done %s188, 128
        $region32: #{tpu_custom_call.1} parent=27 // pred_fallthru
          _
        %s196 = sand.u32 %s80, 1
        %s197 = scalar_lea.sflag [#allocation6], %s196
        %s198 = sand.u32 %s80, 1
        %s199 = smul.addr %s198, 8
        %s200 = scalar_lea.vmem [#allocation5], %s199
        // Predicated region
        $region33: #{tpu_custom_call.1} parent=27 // pred_check
          %p201 = pneg %p93
        $region34: #{tpu_custom_call.1} parent=27 // pred_check_branch
          %203 = sbr.rel (%p201) target = $region36
        $region35: #{tpu_custom_call.1} parent=27 // pred_region
          %204 = dma.done %s197, 128
        $region36: #{tpu_custom_call.1} parent=27 // pred_fallthru
          _
        %s205 = sand.u32 %s48, 1
        %s206 = scalar_lea.sflag [#allocation3], %s205
        %s207 = sand.u32 %s48, 1
        %s208 = smul.addr %s207, 8
        %s209 = scalar_lea.vmem [#allocation2], %s208
        %p210 = pneg %p61
        %p211 = pneg %p58
        %s212 = sand.u32 %s80, 1
        %s213 = scalar_lea.sflag [#allocation6], %s212
        %s214 = sand.u32 %s80, 1
        %s215 = smul.addr %s214, 8
        %s216 = scalar_lea.vmem [#allocation5], %s215
        %p217 = pneg %p93
        %p218 = pneg %p90
        %p219 = pneg %p119
        %p220 = pneg %p116
        %s221 = sand.u32 %s106, 1
        %s222 = scalar_lea.sflag [#allocation4], %s221
        %s223 = sand.u32 %s106, 1
        %s224 = smul.addr %s223, 8
        %s225 = scalar_lea.vmem [#allocation7], %s224
        %s226 = sadd.s32 %s26, %s27
        %p227 = scmp.lt.s32.totalorder %s226, 1
        %s228 = scalar_select %p227, %s226, 1
        %s229 = sadd.s32 %s26, %s27
        %p230 = scmp.lt.s32.totalorder %s229, 1
        %s231 = scalar_select %p230, %s229, 1
        %p232 = scmp.eq.s32.totalorder %s27, 0
        // Predicated region
        $region37: #{tpu_custom_call.1} parent=27 // pred_check
          %p233 = pneg %p232
        $region38: #{tpu_custom_call.1} parent=27 // pred_check_branch
          %235 = sbr.rel (%p233) target = $region40
        $region39: #{tpu_custom_call.1} parent=27 // pred_region
          %236 = vst [vmem:[%s225] sm:$0xff] 0.0
        $region40: #{tpu_custom_call.1} parent=27 // pred_fallthru
          _
        %v237 = vld [vmem:[%s191] sm:$0xff]
        %v238 = vld [vmem:[%s200] sm:$0xff]
        %v239 = vand.u32 2147483647, %v237
        %v240 = vsub.f32 0.0, %v239
        %v241 = vmul.f32 %v240, 1.442695
        %v242 = vpow.pop %v241
        %v243 = vadd.f32 %v242, 1.0
        %v244 = vrcp.pop %v243
        %vm245 = vcmp.ge.f32.partialorder %v237, 0.0
        %v246 = vmul.f32 %v242, %v244
        %v247 = vsel %vm245, %v244, %v246
        %v248 = vmax.f32 %v237, 0.0
        %v249 = vmul.f32 %v237, %v238
        %v250 = vsub.f32 %v248, %v249
        %v251 = vadd.f32 %v242, 1.0
        %v252 = vlog2.pop %v251
        %v253 = vmul.f32 %v252, 0.6931472
        %v254 = vmul.f32 -0.5, %v242
        %v255 = vadd.f32 %v254, 1.0
        %v256 = vmul.f32 %v255, %v242
        %v257 = vand.u32 2147483647, %v242
        %vm258 = vcmp.lt.f32.partialorder %v257, 0.0004427343
        %v259 = vsel %vm258, %v256, %v253
        %v260 = vadd.f32 %v250, %v259
        %v261 = vsub.f32 1.0, %v247
        %v262 = vmul.f32 %v261, %v238
        %v263 = vsub.f32 1.0, %v238
        %v264 = vmul.f32 %v247, %v263
        %v265 = vadd.f32 %v262, %v264
        %v266 = vmul.f32 %v265, %v265
        %v267 = vmul.f32 %v260, %v266
        %v268 = vmul.f32 %v238, 0.25
        %v269 = vmul.f32 %v263, 0.75
        %v270 = vadd.f32 %v268, %v269
        %v271 = vmul.f32 %v270, %v267
        %v272 = vld [vmem:[%s225] sm:$0xff]
        %v273 = vadd.f32 %v271, 0.0
        %v274 = vadd.f32 %v272, %v273
        %275 = vst [vmem:[%s225] sm:$0xff] %v274
        %s276 = sand.u32 %s106, 1
        %s277 = scalar_lea.sflag [#allocation4], %s276
        %s278 = sand.u32 %s106, 1
        %s279 = smul.addr %s278, 8
        %s280 = scalar_lea.vmem [#allocation7], %s279
        // Predicated region
        $region41: #{tpu_custom_call.1} parent=27 // pred_check
          %p281 = pneg %p116
        $region42: #{tpu_custom_call.1} parent=27 // pred_check_branch
          %283 = sbr.rel (%p281) target = $region44
        $region43: #{tpu_custom_call.1} parent=27 // pred_region
          %s285 = ssub.s32 128, 128
          %286 = vsyncadd %s277, %s285
          %s287 = smul.addr %s26, 128
          %s288 = scalar_lea.hbm %s2, %s287
          %s290 = sshll.u32 %s280, 4
          %s291 = int_to_ptr.vmem [resolvable:$true] %s290
          %293 = dma.vmem_to_hbm [thread:$0]  %s291, 128, %s288, %s277
        $region44: #{tpu_custom_call.1} parent=27 // pred_fallthru
          _
      $region28: #{tpu_custom_call.1} parent=5 // pred_fallthru
        _
      %p294 = scmp.le.s32.totalorder 2, %s17
      // Predicated region
      $region45: #{tpu_custom_call.1} parent=5 // pred_check
        %p295 = pneg %p294
      $region46: #{tpu_custom_call.1} parent=5 // pred_check_branch
        %297 = sbr.rel (%p295) target = $region48
      $region47: #{tpu_custom_call.1} parent=5 // pred_region
        %s298 = ssub.s32 %s17, 2
        // Predicated region
        $region49: #{tpu_custom_call.1} parent=47 // pred_check
          %p299 = pneg %p122
        $region50: #{tpu_custom_call.1} parent=47 // pred_check_branch
          %301 = sbr.rel (%p299) target = $region52
        $region51: #{tpu_custom_call.1} parent=47 // pred_region
          %s302 = sand.u32 %s107, 1
          %s303 = scalar_lea.sflag [#allocation4], %s302
          %s304 = sand.u32 %s107, 1
          %s305 = smul.addr %s304, 8
          %s306 = scalar_lea.vmem [#allocation7], %s305
          %307 = dma.done %s303, 128
        $region52: #{tpu_custom_call.1} parent=47 // pred_fallthru
          _
      $region48: #{tpu_custom_call.1} parent=5 // pred_fallthru
        _
    $region6: #{tpu_custom_call.1} parent=1 // loop_footer
      %s21 = sadd.s32 1, %s17
    $region7: #{tpu_custom_call.1} parent=1 // loop_footer_branch
      %16 = sbr.rel target = $region3
    $region8: #{tpu_custom_call.1} parent=1 // loop_exit
      _
    %308 = vsyncpa [#allocation3], 1
    %s309 = scalar_lea.sflag [#allocation3], 1
    %310 = vsyncpa %s309, 1
    %311 = vsyncpa [#allocation6], 1
    %s312 = scalar_lea.sflag [#allocation6], 1
    %313 = vsyncpa %s312, 1
    %314 = vsyncpa [#allocation4], 1
    %s315 = scalar_lea.sflag [#allocation4], 1
    %316 = vsyncpa %s315, 1

</llo_original>
